<compile_context>
chip_gen: v5e
topology: v5e:2x2
jax: 0.10.0
libtpu: 0.0.40
codegen_flags: <defaults>
</compile_context>

<pallas_src>
import jax
import jax.numpy as jnp
from jax.experimental import pallas as pl
from jax.experimental.pallas import tpu as pltpu

C_IN = 512   # conv1 input channels  (nn.Conv2d(512, 2, kernel_size=1, stride=2))
C_OUT = 2    # conv1 output channels
POOL = 4     # AvgPool2d(4) -> one 4x4 window -> 16 stride-2 taps
LANE = 128


def _round_up(x, m):
    return (x + m - 1) // m * m


def pooled_conv1x1_kernel(x_ref, w_ref, b_ref, o_ref):
    # x_ref: [C_IN, TN]   channel-major avg-pooled features
    # w_ref: [C_OUT, C_IN]
    # b_ref: [C_OUT, 1]   f32; added once per sample
    # o_ref: [C_OUT, TN]  lane-dense output block
    y = jnp.dot(w_ref[...], x_ref[...], preferred_element_type=jnp.float32)
    o_ref[...] = (y + b_ref[...]).astype(o_ref.dtype)


def novelmodel_forward(x_nchw, w_oihw, bias, *, compute_dtype=jnp.bfloat16,
                       block_n=1024):
    """x_nchw: [N, 512, H, W] feature map (backbone output), f32.
       w_oihw: [2, 512, 1, 1] conv1 weight; bias: [2].  Returns [N, 2] f32."""
    N, C, H, W = x_nchw.shape
    assert C == C_IN
    # The AvgPool2d(4) window selected by [:, :, 0, 0] needs conv-output rows/
    # cols 0..3, i.e. input positions 0, 2, 4, 6 -> H, W must be >= 7.
    assert H >= 2 * POOL - 1 and W >= 2 * POOL - 1, "need H, W >= 7"
    assert block_n % LANE == 0, "block_n must be a multiple of 128"

    # ---- batch tiling (minor dim of the flipped layout) ----------------------
    if N <= LANE:
        # single full-extent block (allowed even if not a multiple of 128)
        tn, n_pad = N, N
    else:
        # >=2 grid steps so v7x megacore gets both TensorCores busy; tiles stay
        # a multiple of 128 lanes and well under VMEM limits.
        tn = min(block_n, _round_up(pl.cdiv(N, 2), LANE))
        n_pad = _round_up(N, tn)
    grid = (n_pad // tn,)

    # ---- pool before the (linear) 1x1 conv, channel-major, pad fused ---------
    xs = x_nchw[:, :, 0:2 * POOL:2, 0:2 * POOL:2]            # [N, 512, 4, 4]
    if n_pad != N:
        # Pad the tap slice BEFORE the reduction so XLA fuses it (no standalone
        # read+write pass over the pooled features).
        xs = jnp.pad(xs, ((0, n_pad - N), (0, 0), (0, 0), (0, 0)))
    x_cm = jnp.mean(jnp.transpose(xs, (1, 0, 2, 3)),
                    axis=(2, 3)).astype(compute_dtype)        # [512, n_pad]

    w2 = w_oihw.reshape(C_OUT, C_IN).astype(compute_dtype)    # [2, 512]
    b2 = bias.reshape(C_OUT, 1).astype(jnp.float32)           # [2, 1]

    in_bytes = jnp.dtype(compute_dtype).itemsize
    cost = pl.CostEstimate(
        flops=2 * n_pad * C_IN * C_OUT,
        transcendentals=0,
        bytes_accessed=(C_IN * n_pad + C_OUT * C_IN) * in_bytes
                       + (C_OUT * n_pad + C_OUT) * 4)

    out_t = pl.pallas_call(
        pooled_conv1x1_kernel,
        out_shape=jax.ShapeDtypeStruct((C_OUT, n_pad), jnp.float32),
        grid=grid,
        in_specs=[
            pl.BlockSpec((C_IN, tn), lambda i: (0, i)),
            pl.BlockSpec((C_OUT, C_IN), lambda i: (0, 0)),
            pl.BlockSpec((C_OUT, 1), lambda i: (0, 0)),
        ],
        out_specs=pl.BlockSpec((C_OUT, tn), lambda i: (0, i)),
        compiler_params=pltpu.CompilerParams(
            dimension_semantics=("parallel",)),
        cost_estimate=cost,
    )(x_cm, w2, b2)

    return out_t[:, :N].T                                      # [N, 2] f32


def reference_forward(x_nchw, w_oihw, bias):
    y = jax.lax.conv_general_dilated(
        x_nchw, w_oihw, window_strides=(2, 2), padding="VALID",
        dimension_numbers=("NCHW", "OIHW", "NCHW"))
    y = y + bias[None, :, None, None]
    p = jax.lax.reduce_window(
        y, 0.0, jax.lax.add,
        window_dimensions=(1, 1, POOL, POOL),
        window_strides=(1, 1, POOL, POOL),
        padding="VALID") / float(POOL * POOL)
    return p[:, :, 0, 0]


if __name__ == "__main__":
    key = jax.random.PRNGKey(0)
    kx, kw, kb, kx2 = jax.random.split(key, 4)

    # ResNet18 feature map shape is [N, 512, 7, 7]; keep N small.
    N, H, W = 2, 7, 7
    x = jax.random.normal(kx, (N, C_IN, H, W), dtype=jnp.float32)

    fan_in = C_IN * 1 * 1
    bound = 1.0 / (fan_in ** 0.5)
    w = jax.random.uniform(kw, (C_OUT, C_IN, 1, 1), jnp.float32, -bound, bound)
    b = jax.random.uniform(kb, (C_OUT,), jnp.float32, -bound, bound)

    fwd = jax.jit(novelmodel_forward, static_argnames=("compute_dtype", "block_n"))

    # f32 path (matches the PyTorch module numerics) -- tight tolerance.
    out_f32 = jax.block_until_ready(fwd(x, w, b, compute_dtype=jnp.float32))
    ref = jax.block_until_ready(reference_forward(x, w, b))
    assert out_f32.shape == (N, C_OUT)
    assert jnp.allclose(out_f32, ref, atol=1e-4, rtol=1e-4), (out_f32, ref)

    # Default bf16 feature/weight path (f32 MXU accumulation) -- halves DMA;
    # ~1e-2 relative error from input rounding only.
    out_bf16 = jax.block_until_ready(fwd(x, w, b))
    assert jnp.allclose(out_bf16, ref, atol=3e-2, rtol=3e-2), (out_bf16, ref)

    # Exercise the batch-tiled (grid > 1, fused-pad) path: N=130 -> tn=128,
    # n_pad=256, grid=(2,).
    N2 = 130
    x2 = jax.random.normal(kx2, (N2, C_IN, H, W), dtype=jnp.float32)
    out2 = jax.block_until_ready(fwd(x2, w, b, compute_dtype=jnp.float32))
    ref2 = jax.block_until_ready(reference_forward(x2, w, b))
    assert out2.shape == (N2, C_OUT)
    assert jnp.allclose(out2, ref2, atol=1e-4, rtol=1e-4), (out2, ref2)

    print("KERNEL_OK")
</pallas_src>

<mosaic_0001>
module attributes {stable_mosaic.version = 11 : i64} {
  func.func @pooled_conv1x1_kernel(%arg0: i32, %arg1: memref<512x2xf32, #tpu.memory_space<vmem>>, %arg2: memref<2x512xf32, #tpu.memory_space<vmem>>, %arg3: memref<2x1xf32, #tpu.memory_space<vmem>>, %arg4: memref<2x2xf32, #tpu.memory_space<vmem>>) attributes {dimension_semantics = [#tpu.dimension_semantics<parallel>], iteration_bounds = array<i64: 1>, scalar_prefetch = 0 : i64, scratch_operands = 0 : i64, tpu.core_type = #tpu.core_type<tc>, window_params = [{transform_indices = @transform_0, window_bounds = array<i64: 512, 2>}, {pipeline_mode = #tpu.pipeline_mode<synchronous>, transform_indices = @transform_1, window_bounds = array<i64: 2, 512>}, {pipeline_mode = #tpu.pipeline_mode<synchronous>, transform_indices = @transform_2, window_bounds = array<i64: 2, 1>}, {transform_indices = @transform_3, window_bounds = array<i64: 2, 2>}]} {
    %c0 = arith.constant 0 : index
    %c0_0 = arith.constant 0 : index
    %0 = vector.load %arg2[%c0, %c0_0] : memref<2x512xf32, #tpu.memory_space<vmem>>, vector<2x512xf32>
    %c0_1 = arith.constant 0 : index
    %c0_2 = arith.constant 0 : index
    %1 = vector.load %arg1[%c0_1, %c0_2] : memref<512x2xf32, #tpu.memory_space<vmem>>, vector<512x2xf32>
    %cst = arith.constant dense<0.000000e+00> : vector<2x2xf32>
    %2 = tpu.matmul %0, %1, %cst {dimension_numbers = #tpu.dot_dimension_numbers<[1], [0], [0], [1], [0, 0, 1, 1], [], []>} : vector<2x512xf32>, vector<512x2xf32>, vector<2x2xf32> -> vector<2x2xf32>
    %c0_3 = arith.constant 0 : index
    %c0_4 = arith.constant 0 : index
    %3 = vector.load %arg3[%c0_3, %c0_4] : memref<2x1xf32, #tpu.memory_space<vmem>>, vector<2x1xf32>
    %4 = vector.broadcast %3 : vector<2x1xf32> to vector<2x2xf32>
    %5 = arith.addf %2, %4 : vector<2x2xf32>
    %c0_5 = arith.constant 0 : index
    %c0_6 = arith.constant 0 : index
    %6 = vector.load %arg4[%c0_5, %c0_6] : memref<2x2xf32, #tpu.memory_space<vmem>>, vector<2x2xf32>
    tpu.vector_store %arg4[%c0_5, %c0_6], %5 {strides = array<i32>} : memref<2x2xf32, #tpu.memory_space<vmem>>, vector<2x2xf32>,
    return
  }
  func.func @transform_0(%arg0: i32) -> (i32, i32) {
    %c0_i32 = arith.constant 0 : i32
    %c0_i32_0 = arith.constant 0 : i32
    return %c0_i32, %arg0 : i32, i32
  }
  func.func @transform_1(%arg0: i32) -> (i32, i32) {
    %c0_i32 = arith.constant 0 : i32
    %c0_i32_0 = arith.constant 0 : i32
    %c0_i32_1 = arith.constant 0 : i32
    return %c0_i32, %c0_i32_0 : i32, i32
  }
  func.func @transform_2(%arg0: i32) -> (i32, i32) {
    %c0_i32 = arith.constant 0 : i32
    %c0_i32_0 = arith.constant 0 : i32
    %c0_i32_1 = arith.constant 0 : i32
    return %c0_i32, %c0_i32_0 : i32, i32
  }
  func.func @transform_3(%arg0: i32) -> (i32, i32) {
    %c0_i32 = arith.constant 0 : i32
    %c0_i32_0 = arith.constant 0 : i32
    return %c0_i32, %arg0 : i32, i32
  }
}

</mosaic_0001>

<llo_original>
// kernel: novelmodel_forward.1
$region0: #{novelmodel_forward.1}
  #allocation0 [shape = 'u32[]', space=smem, size = 0x4, offset = 0x4, fixed_abs, tag = 'smem constant byte address 0x4 - core index']
  #allocation1 [shape = 'u32[72,128]{1,0:T(1,128)}', space=vmem, size = 0x9000, scoped, tag = 'internal scratch']
  %s0 = inlined_call_operand.vmem [shape: f32[512,2], index: 0, kind: input, shape index: {}]
  %s1 = inlined_call_operand.vmem [shape: f32[2,512], index: 1, kind: input, shape index: {}]
  %s2 = inlined_call_operand.vmem [shape: f32[2,1], index: 2, kind: input, shape index: {}]
  %s3 = inlined_call_operand.vmem [shape: f32[2,2], index: 3, kind: output, shape index: {}]
  %s4 = sld [smem:[#allocation0]]
  $region22: #{novelmodel_forward.1} parent=0
    _
  %s6 = ssub.s32 1, %s4
  %s7 = scalar_select 0, %s6, %s4
  // Predicated region
  $region2: #{novelmodel_forward.1} parent=0 // pred_check
    _
  $region3: #{novelmodel_forward.1} parent=0 // pred_check_branch
    %9 = sbr.rel (0) target = $region5
  $region4: #{novelmodel_forward.1} parent=0 // pred_region
    _
  $region5: #{novelmodel_forward.1} parent=0 // pred_fallthru
    _
  // Predicated region
  $region6: #{novelmodel_forward.1} parent=0 // pred_check
    _
  $region7: #{novelmodel_forward.1} parent=0 // pred_check_branch
    %11 = sbr.rel (0) target = $region9
  $region8: #{novelmodel_forward.1} parent=0 // pred_region
    _
  $region9: #{novelmodel_forward.1} parent=0 // pred_fallthru
    _
  // Predicated region
  $region10: #{novelmodel_forward.1} parent=0 // pred_check
    _
  $region11: #{novelmodel_forward.1} parent=0 // pred_check_branch
    %13 = sbr.rel (0) target = $region13
  $region12: #{novelmodel_forward.1} parent=0 // pred_region
    _
  $region13: #{novelmodel_forward.1} parent=0 // pred_fallthru
    _
  %v14 = vld [vmem:[%s1] sm:$0xff]
  %v15 = vld [vmem:[%s0] sm:$0xff]
  %v16 = vld [vmem:[%s0 + $0x8] sm:$0xff]
  %v17 = vld [vmem:[%s0 + $0x10] sm:$0xff]
  %v18 = vld [vmem:[%s0 + $0x18] sm:$0xff]
  %v19 = vld [vmem:[%s0 + $0x20] sm:$0xff]
  %v20 = vld [vmem:[%s0 + $0x28] sm:$0xff]
  %v21 = vld [vmem:[%s0 + $0x30] sm:$0xff]
  %v22 = vld [vmem:[%s0 + $0x38] sm:$0xff]
  %v23 = vld [vmem:[%s0 + $0x40] sm:$0xff]
  %v24 = vld [vmem:[%s0 + $0x48] sm:$0xff]
  %v25 = vld [vmem:[%s0 + $0x50] sm:$0xff]
  %v26 = vld [vmem:[%s0 + $0x58] sm:$0xff]
  %v27 = vld [vmem:[%s0 + $0x60] sm:$0xff]
  %v28 = vld [vmem:[%s0 + $0x68] sm:$0xff]
  %v29 = vld [vmem:[%s0 + $0x70] sm:$0xff]
  %v30 = vld [vmem:[%s0 + $0x78] sm:$0xff]
  %v31 = vld [vmem:[%s0 + $0x80] sm:$0xff]
  %v32 = vld [vmem:[%s0 + $0x88] sm:$0xff]
  %v33 = vld [vmem:[%s0 + $0x90] sm:$0xff]
  %v34 = vld [vmem:[%s0 + $0x98] sm:$0xff]
  %v35 = vld [vmem:[%s0 + $0xa0] sm:$0xff]
  %v36 = vld [vmem:[%s0 + $0xa8] sm:$0xff]
  %v37 = vld [vmem:[%s0 + $0xb0] sm:$0xff]
  %v38 = vld [vmem:[%s0 + $0xb8] sm:$0xff]
  %v39 = vld [vmem:[%s0 + $0xc0] sm:$0xff]
  %v40 = vld [vmem:[%s0 + $0xc8] sm:$0xff]
  %v41 = vld [vmem:[%s0 + $0xd0] sm:$0xff]
  %v42 = vld [vmem:[%s0 + $0xd8] sm:$0xff]
  %v43 = vld [vmem:[%s0 + $0xe0] sm:$0xff]
  %v44 = vld [vmem:[%s0 + $0xe8] sm:$0xff]
  %v45 = vld [vmem:[%s0 + $0xf0] sm:$0xff]
  %v46 = vld [vmem:[%s0 + $0xf8] sm:$0xff]
  %v47 = vld [vmem:[%s0 + $0x100] sm:$0xff]
  %v48 = vld [vmem:[%s0 + $0x108] sm:$0xff]
  %v49 = vld [vmem:[%s0 + $0x110] sm:$0xff]
  %v50 = vld [vmem:[%s0 + $0x118] sm:$0xff]
  %v51 = vld [vmem:[%s0 + $0x120] sm:$0xff]
  %v52 = vld [vmem:[%s0 + $0x128] sm:$0xff]
  %v53 = vld [vmem:[%s0 + $0x130] sm:$0xff]
  %v54 = vld [vmem:[%s0 + $0x138] sm:$0xff]
  %v55 = vld [vmem:[%s0 + $0x140] sm:$0xff]
  %v56 = vld [vmem:[%s0 + $0x148] sm:$0xff]
  %v57 = vld [vmem:[%s0 + $0x150] sm:$0xff]
  %v58 = vld [vmem:[%s0 + $0x158] sm:$0xff]
  %v59 = vld [vmem:[%s0 + $0x160] sm:$0xff]
  %v60 = vld [vmem:[%s0 + $0x168] sm:$0xff]
  %v61 = vld [vmem:[%s0 + $0x170] sm:$0xff]
  %v62 = vld [vmem:[%s0 + $0x178] sm:$0xff]
  %v63 = vld [vmem:[%s0 + $0x180] sm:$0xff]
  %v64 = vld [vmem:[%s0 + $0x188] sm:$0xff]
  %v65 = vld [vmem:[%s0 + $0x190] sm:$0xff]
  %v66 = vld [vmem:[%s0 + $0x198] sm:$0xff]
  %v67 = vld [vmem:[%s0 + $0x1a0] sm:$0xff]
  %v68 = vld [vmem:[%s0 + $0x1a8] sm:$0xff]
  %v69 = vld [vmem:[%s0 + $0x1b0] sm:$0xff]
  %v70 = vld [vmem:[%s0 + $0x1b8] sm:$0xff]
  %v71 = vld [vmem:[%s0 + $0x1c0] sm:$0xff]
  %v72 = vld [vmem:[%s0 + $0x1c8] sm:$0xff]
  %v73 = vld [vmem:[%s0 + $0x1d0] sm:$0xff]
  %v74 = vld [vmem:[%s0 + $0x1d8] sm:$0xff]
  %v75 = vld [vmem:[%s0 + $0x1e0] sm:$0xff]
  %v76 = vld [vmem:[%s0 + $0x1e8] sm:$0xff]
  %v77 = vld [vmem:[%s0 + $0x1f0] sm:$0xff]
  %v78 = vld [vmem:[%s0 + $0x1f8] sm:$0xff]
  %v79 = vld [vmem:[%s2] sm:$0x3]
  %81 = vset.pattern.permute.xlu0 0
  %82 = vperm.xlu0 %81, %v79
  %v83 = vpop.permute.xlu0 %82
  %86 = vst [vmem:[#allocation1] ss:$4 sm:$0xff] %v14
  %v87 = vld.sshfl [vmem:[#allocation1] sm:$0xff pattern:$0x73625140]
  %v88 = vld.sshfl [vmem:[#allocation1 + $0x8] sm:$0xff pattern:$0x73625140]
  %v89 = vld.sshfl [vmem:[#allocation1 + $0x10] sm:$0xff pattern:$0x73625140]
  %v90 = vld.sshfl [vmem:[#allocation1 + $0x18] sm:$0xff pattern:$0x73625140]
  %95 = vmatpush.msra.mxu0 %v30
  %96 = vmatpush.msra.mxu0 %v29
  %97 = vmatpush.msra.mxu0 %v28
  %98 = vmatpush.msra.mxu0 %v27
  %99 = vmatpush.msra.mxu0 %v26
  %100 = vmatpush.msra.mxu0 %v25
  %101 = vmatpush.msra.mxu0 %v24
  %102 = vmatpush.msra.mxu0 %v23
  %103 = vmatpush.msra.mxu0 %v22
  %104 = vmatpush.msra.mxu0 %v21
  %105 = vmatpush.msra.mxu0 %v20
  %106 = vmatpush.msra.mxu0 %v19
  %107 = vmatpush.msra.mxu0 %v18
  %108 = vmatpush.msra.mxu0 %v17
  %109 = vmatpush.msra.mxu0 %v16
  %110 = vmatpush.msra.mxu0 %v15
  %111 = vmatmul.f32.gmra.mxu0 %v87
  %v112 = vpop.f32.mrf.mxu0
  %v113 = vadd.f32 %v83, %v112
  %114 = vdwg.mxu0
  %115 = vmatpush.msra.mxu0 %v46
  %116 = vmatpush.msra.mxu0 %v45
  %117 = vmatpush.msra.mxu0 %v44
  %118 = vmatpush.msra.mxu0 %v43
  %119 = vmatpush.msra.mxu0 %v42
  %120 = vmatpush.msra.mxu0 %v41
  %121 = vmatpush.msra.mxu0 %v40
  %122 = vmatpush.msra.mxu0 %v39
  %123 = vmatpush.msra.mxu0 %v38
  %124 = vmatpush.msra.mxu0 %v37
  %125 = vmatpush.msra.mxu0 %v36
  %126 = vmatpush.msra.mxu0 %v35
  %127 = vmatpush.msra.mxu0 %v34
  %128 = vmatpush.msra.mxu0 %v33
  %129 = vmatpush.msra.mxu0 %v32
  %130 = vmatpush.msra.mxu0 %v31
  %131 = vmatmul.f32.gmra.mxu0 %v88
  %v132 = vpop.f32.mrf.mxu0
  %v133 = vadd.f32 %v113, %v132
  %134 = vdwg.mxu0
  %135 = vmatpush.msra.mxu0 %v62
  %136 = vmatpush.msra.mxu0 %v61
  %137 = vmatpush.msra.mxu0 %v60
  %138 = vmatpush.msra.mxu0 %v59
  %139 = vmatpush.msra.mxu0 %v58
  %140 = vmatpush.msra.mxu0 %v57
  %141 = vmatpush.msra.mxu0 %v56
  %142 = vmatpush.msra.mxu0 %v55
  %143 = vmatpush.msra.mxu0 %v54
  %144 = vmatpush.msra.mxu0 %v53
  %145 = vmatpush.msra.mxu0 %v52
  %146 = vmatpush.msra.mxu0 %v51
  %147 = vmatpush.msra.mxu0 %v50
  %148 = vmatpush.msra.mxu0 %v49
  %149 = vmatpush.msra.mxu0 %v48
  %150 = vmatpush.msra.mxu0 %v47
  %151 = vmatmul.f32.gmra.mxu0 %v89
  %v152 = vpop.f32.mrf.mxu0
  %v153 = vadd.f32 %v133, %v152
  %154 = vdwg.mxu0
  %155 = vmatpush.msra.mxu0 %v78
  %156 = vmatpush.msra.mxu0 %v77
  %157 = vmatpush.msra.mxu0 %v76
  %158 = vmatpush.msra.mxu0 %v75
  %159 = vmatpush.msra.mxu0 %v74
  %160 = vmatpush.msra.mxu0 %v73
  %161 = vmatpush.msra.mxu0 %v72
  %162 = vmatpush.msra.mxu0 %v71
  %163 = vmatpush.msra.mxu0 %v70
  %164 = vmatpush.msra.mxu0 %v69
  %165 = vmatpush.msra.mxu0 %v68
  %166 = vmatpush.msra.mxu0 %v67
  %167 = vmatpush.msra.mxu0 %v66
  %168 = vmatpush.msra.mxu0 %v65
  %169 = vmatpush.msra.mxu0 %v64
  %170 = vmatpush.msra.mxu0 %v63
  %171 = vmatmul.f32.gmra.mxu0 %v90
  %v172 = vpop.f32.mrf.mxu0
  %v173 = vadd.f32 %v153, %v172
  %174 = vdwg.mxu0
  %vm175 = vcmask 9216
  %176 = vst.msk [vmem:[%s3] sm:$0x3] %vm175, %v173
  // Predicated region
  $region14: #{novelmodel_forward.1} parent=0 // pred_check
    _
  $region15: #{novelmodel_forward.1} parent=0 // pred_check_branch
    %178 = sbr.rel (0) target = $region17
  $region16: #{novelmodel_forward.1} parent=0 // pred_region
    _
  $region17: #{novelmodel_forward.1} parent=0 // pred_fallthru
    _
  // Predicated region
  $region18: #{novelmodel_forward.1} parent=0 // pred_check
    _
  $region19: #{novelmodel_forward.1} parent=0 // pred_check_branch
    %180 = sbr.rel (0) target = $region21
  $region20: #{novelmodel_forward.1} parent=0 // pred_region
    _
  $region21: #{novelmodel_forward.1} parent=0 // pred_fallthru
    _

</llo_original>
